<compile_context>
chip_gen: v5e
topology: v5e:2x2
jax: 0.10.0
libtpu: 0.0.40
codegen_flags: <defaults>
</compile_context>

<pallas_src>
import functools

import jax
import jax.numpy as jnp
from jax.experimental import pallas as pl
from jax.experimental.pallas import tpu as pltpu


def _apply_act(x, act):
    if act == "leaky_relu":          # nn.LeakyReLU(negative_slope=0.02)
        return jnp.where(x >= 0, x, 0.02 * x)
    if act == "tanh":
        return jnp.tanh(x)
    if act == "none":
        return x
    raise ValueError(f"unsupported activation {act}")


# ----------------------------------------------------------------------------
# Fused kernel: all IMNET layers for one (TN,) row tile of one batch element.
# ----------------------------------------------------------------------------
def _imnet_fused_kernel(coords_ref, *refs, num_hidden, acts):
    """refs = [w0c, zb0, (wh_i, wc_i, zb_i)*num_hidden, wf, bf, out_ref]

    w0c : (1, H0)      coords column of layer-0 weight (omega & coord_multi folded)
    zb0 : (1, H0)      per-batch  z @ W0_z + bias      (omega folded)
    wh_i: (Hprev, Hi)  hidden weight block acting on previous activations
    wc_i: (1, Hi)      coords column of hidden weight  (omega & coord_multi folded)
    zb_i: (1, Hi)      per-batch  z @ Wz_i + bias
    wf  : (Hlast, out) final weight, bf: (1, out) final bias
    """
    out_ref = refs[-1]
    in_refs = refs[:-1]

    c = coords_ref[...]                                      # (TN, 1) raw coords

    idx = 0
    w0c = in_refs[idx][...]
    zb0 = in_refs[idx + 1][...]
    idx += 2
    # layer 0: activation(coords*coord_multi @ W0_c + z @ W0_z + b0) -- the
    # coords term is a rank-1 outer product, done on the VPU via broadcast.
    h = _apply_act(c * w0c + zb0, acts[0])                   # (TN, H0)

    for i in range(num_hidden):
        wh = in_refs[idx][...]
        wc = in_refs[idx + 1][...]
        zb = in_refs[idx + 2][...]
        idx += 3
        y = jnp.dot(h, wh, preferred_element_type=jnp.float32)   # MXU
        y = y + c * wc + zb
        h = _apply_act(y, acts[1 + i])

    wf = in_refs[idx][...]
    bf = in_refs[idx + 1][...]
    y = jnp.dot(h, wf, preferred_element_type=jnp.float32) + bf
    # NOTE: out_features < 128 -> lane-masked store.  Padding the output to 128
    # lanes would inflate HBM write traffic 64x, and the fused kernel is
    # MXU-dominated, so the narrow store is the better tradeoff here.
    out_ref[...] = _apply_act(y, acts[-1]).astype(out_ref.dtype)


# ----------------------------------------------------------------------------
# Wrapper: fold omega/bias/coord_multi, split weights, tile rows, launch kernel
# ----------------------------------------------------------------------------
def _round_up(a, m):
    return ((a + m - 1) // m) * m


def imnet_forward(params, coordinates, z, coord_multi=900.0, tile_n=512):
    """params: list of (W (in,out), b (out,), omega (out,), act) per layer."""
    B, N, cin = coordinates.shape
    assert cin == 1, "IMNET coordinates are scalar per point"
    Z = z.shape[-1]
    z2d = z.reshape(B, Z).astype(jnp.float32)
    dtype = coordinates.dtype

    num_layers = len(params)
    num_hidden = num_layers - 2
    acts = tuple(p[3] for p in params)

    # --- fold omega / bias / coord_multi, split weights (tiny, plain XLA) ----
    kernel_inputs = []
    in_specs = []

    def w_spec(shape):                     # resident weight: same block every step
        return pl.BlockSpec(shape, lambda b, j: (0, 0))

    def zb_spec(H):                        # per-batch bias, stored as (B, 1, H)
        return pl.BlockSpec((None, 1, H), lambda b, j: (b, 0, 0))

    # layer 0: torch input order is [coords, z]
    w0, b0, om0, _ = params[0]
    H0 = w0.shape[1]
    w0c = (w0[:1, :] * om0) * coord_multi                   # (1, H0)
    zb0 = z2d @ (w0[1:, :] * om0) + b0 * om0                # (B, H0)
    kernel_inputs += [w0c, zb0[:, None, :]]
    in_specs += [w_spec((1, H0)), zb_spec(H0)]

    h_prev = H0
    for (w, b, om, _) in params[1:-1]:     # torch input order is [h, z, coords]
        Hi = w.shape[1]
        wh = w[:h_prev, :] * om                             # (Hprev, Hi)
        wz = w[h_prev:h_prev + Z, :] * om                   # (Z, Hi)
        wc = (w[h_prev + Z:, :] * om) * coord_multi         # (1, Hi)
        zb = z2d @ wz + b * om                              # (B, Hi)
        kernel_inputs += [wh, wc, zb[:, None, :]]
        in_specs += [w_spec((h_prev, Hi)), w_spec((1, Hi)), zb_spec(Hi)]
        h_prev = Hi

    wfin, bfin, omfin, _ = params[-1]
    out_features = wfin.shape[1]
    wf = wfin * omfin
    bf = (bfin * omfin).reshape(1, out_features)
    kernel_inputs += [wf, bf]
    in_specs += [w_spec((h_prev, out_features)), w_spec((1, out_features))]

    # --- row tiling over N (pad N to a multiple of the tile) -----------------
    TN = tile_n if N >= tile_n else _round_up(N, 8)
    N_pad = _round_up(N, TN)
    coords_p = coordinates
    if N_pad != N:
        coords_p = jnp.pad(coordinates, ((0, 0), (0, N_pad - N), (0, 0)))

    grid = (B, N_pad // TN)
    kernel = functools.partial(_imnet_fused_kernel,
                               num_hidden=num_hidden, acts=acts)
    out = pl.pallas_call(
        kernel,
        out_shape=jax.ShapeDtypeStruct((B, N_pad, out_features), dtype),
        grid=grid,
        in_specs=[pl.BlockSpec((None, TN, 1), lambda b, j: (b, j, 0))] + in_specs,
        out_specs=pl.BlockSpec((None, TN, out_features), lambda b, j: (b, j, 0)),
        compiler_params=pltpu.CompilerParams(
            dimension_semantics=("parallel", "parallel"),
            vmem_limit_bytes=48 * 1024 * 1024,   # headroom, still < v7x 64 MiB
        ),
    )(coords_p, *kernel_inputs)

    if N_pad != N:
        out = out[:, :N, :]
    return out


# ----------------------------------------------------------------------------
# Parameter construction (mirrors IMNET defaults: normal(0, 0.02) weights,
# zero bias, omega_0 = 1).  Layer-0 input is always [coord(1), z].
# ----------------------------------------------------------------------------
def build_imnet_params(key, out_features, num_layers, initial_hidden, z_size):
    dims = [(1 + z_size, initial_hidden, "leaky_relu")]
    for i in range(num_layers - 1):
        dims.append((initial_hidden // 2 ** i + z_size + 1,
                     initial_hidden // 2 ** (i + 1), "leaky_relu"))
    dims.append((initial_hidden // 2 ** (num_layers - 1), out_features, "tanh"))

    params = []
    for (fin, fout, act) in dims:
        key, kw = jax.random.split(key)
        w = 0.02 * jax.random.normal(kw, (fin, fout), dtype=jnp.float32)
        b = jnp.zeros((fout,), dtype=jnp.float32)
        om = jnp.ones((fout,), dtype=jnp.float32)   # omega_0 = 1
        params.append((w, b, om, act))
    return params


# ----------------------------------------------------------------------------
# Plain-JAX reference (original concat-based math) for correctness check
# ----------------------------------------------------------------------------
def imnet_reference(params, coordinates, z, coord_multi=900.0):
    B, N, _ = coordinates.shape
    Z = z.shape[-1]
    coords = coordinates * coord_multi
    z_rep = jnp.broadcast_to(z, (B, N, Z))

    def layer(x, w, b, om, act):
        return _apply_act(om * (x @ w + b), act)

    x0 = jnp.concatenate([coords, z_rep], axis=-1).reshape(B * N, -1)
    w, b, om, act = params[0]
    h = layer(x0, w, b, om, act)
    z_cond = jnp.concatenate([z_rep, coords], axis=-1).reshape(B * N, -1)
    for (w, b, om, act) in params[1:-1]:
        h = layer(jnp.concatenate([h, z_cond], axis=-1), w, b, om, act)
    w, b, om, act = params[-1]
    return layer(h, w, b, om, act).reshape(B, N, -1)


if __name__ == "__main__":
    # small shapes consistent with the module's forward
    B, N = 2, 8            # batch, number of coordinate points
    out_features = 2
    num_layers = 3
    initial_hidden = 64
    z_size = 32

    key = jax.random.PRNGKey(0)
    key, kc, kz, kp = jax.random.split(key, 4)
    coordinates = jax.random.uniform(kc, (B, N, 1), dtype=jnp.float32)
    z = jax.random.normal(kz, (B, 1, z_size), dtype=jnp.float32)

    params = build_imnet_params(kp, out_features, num_layers,
                                initial_hidden, z_size)

    out = jax.block_until_ready(imnet_forward(params, coordinates, z))
    ref = imnet_reference(params, coordinates, z)

    assert out.shape == (B, N, out_features)
    assert jnp.allclose(out, ref, atol=1e-4, rtol=1e-4), (
        "max abs diff:", float(jnp.max(jnp.abs(out - ref))))

    # TODO(synk): torch's coordinates.clone().detach().requires_grad_(True) is
    # autograd bookkeeping with no effect on the forward values; not translated.
    print("KERNEL_OK")
</pallas_src>

<mosaic_0001>
module attributes {stable_mosaic.version = 11 : i64} {
  func.func @_imnet_fused_kernel(%arg0: i32, %arg1: i32, %arg2: memref<1x8x1xf32, #tpu.memory_space<vmem>>, %arg3: memref<1x64xf32, #tpu.memory_space<vmem>>, %arg4: memref<1x1x64xf32, #tpu.memory_space<vmem>>, %arg5: memref<64x32xf32, #tpu.memory_space<vmem>>, %arg6: memref<1x32xf32, #tpu.memory_space<vmem>>, %arg7: memref<1x1x32xf32, #tpu.memory_space<vmem>>, %arg8: memref<32x16xf32, #tpu.memory_space<vmem>>, %arg9: memref<1x16xf32, #tpu.memory_space<vmem>>, %arg10: memref<1x1x16xf32, #tpu.memory_space<vmem>>, %arg11: memref<16x2xf32, #tpu.memory_space<vmem>>, %arg12: memref<1x2xf32, #tpu.memory_space<vmem>>, %arg13: memref<1x8x2xf32, #tpu.memory_space<vmem>>) attributes {dimension_semantics = [#tpu.dimension_semantics<parallel>, #tpu.dimension_semantics<parallel>], iteration_bounds = array<i64: 2, 1>, scalar_prefetch = 0 : i64, scratch_operands = 0 : i64, tpu.core_type = #tpu.core_type<tc>, window_params = [{transform_indices = @transform_0, window_bounds = array<i64: 1, 8, 1>}, {pipeline_mode = #tpu.pipeline_mode<synchronous>, transform_indices = @transform_1, window_bounds = array<i64: 1, 64>}, {transform_indices = @transform_2, window_bounds = array<i64: 1, 1, 64>}, {pipeline_mode = #tpu.pipeline_mode<synchronous>, transform_indices = @transform_3, window_bounds = array<i64: 64, 32>}, {pipeline_mode = #tpu.pipeline_mode<synchronous>, transform_indices = @transform_4, window_bounds = array<i64: 1, 32>}, {transform_indices = @transform_5, window_bounds = array<i64: 1, 1, 32>}, {pipeline_mode = #tpu.pipeline_mode<synchronous>, transform_indices = @transform_6, window_bounds = array<i64: 32, 16>}, {pipeline_mode = #tpu.pipeline_mode<synchronous>, transform_indices = @transform_7, window_bounds = array<i64: 1, 16>}, {transform_indices = @transform_8, window_bounds = array<i64: 1, 1, 16>}, {pipeline_mode = #tpu.pipeline_mode<synchronous>, transform_indices = @transform_9, window_bounds = array<i64: 16, 2>}, {pipeline_mode = #tpu.pipeline_mode<synchronous>, transform_indices = @transform_10, window_bounds = array<i64: 1, 2>}, {transform_indices = @transform_11, window_bounds = array<i64: 1, 8, 2>}]} {
    %c0 = arith.constant 0 : index
    %c0_0 = arith.constant 0 : index
    %c0_1 = arith.constant 0 : index
    %0 = vector.load %arg2[%c0, %c0_0, %c0_1] : memref<1x8x1xf32, #tpu.memory_space<vmem>>, vector<1x8x1xf32>
    %1 = vector.shape_cast %0 : vector<1x8x1xf32> to vector<8x1xf32>
    %c0_2 = arith.constant 0 : index
    %c0_3 = arith.constant 0 : index
    %2 = vector.load %arg3[%c0_2, %c0_3] : memref<1x64xf32, #tpu.memory_space<vmem>>, vector<1x64xf32>
    %c0_4 = arith.constant 0 : index
    %c0_5 = arith.constant 0 : index
    %c0_6 = arith.constant 0 : index
    %3 = vector.load %arg4[%c0_4, %c0_5, %c0_6] : memref<1x1x64xf32, #tpu.memory_space<vmem>>, vector<1x1x64xf32>
    %4 = vector.shape_cast %3 : vector<1x1x64xf32> to vector<1x64xf32>
    %5 = vector.broadcast %1 : vector<8x1xf32> to vector<8x64xf32>
    %6 = vector.broadcast %2 : vector<1x64xf32> to vector<8x64xf32>
    %7 = arith.mulf %5, %6 : vector<8x64xf32>
    %8 = vector.broadcast %4 : vector<1x64xf32> to vector<8x64xf32>
    %9 = arith.addf %7, %8 : vector<8x64xf32>
    %cst = arith.constant 0.000000e+00 : f32
    %10 = vector.broadcast %cst : f32 to vector<8x64xf32>
    %11 = arith.cmpf oge, %9, %10 : vector<8x64xf32>
    %cst_7 = arith.constant 2.000000e-02 : f32
    %12 = vector.broadcast %cst_7 : f32 to vector<8x64xf32>
    %13 = arith.mulf %12, %9 : vector<8x64xf32>
    %14 = arith.select %11, %9, %13 : vector<8x64xi1>, vector<8x64xf32>
    %c0_8 = arith.constant 0 : index
    %c0_9 = arith.constant 0 : index
    %15 = vector.load %arg5[%c0_8, %c0_9] : memref<64x32xf32, #tpu.memory_space<vmem>>, vector<64x32xf32>
    %c0_10 = arith.constant 0 : index
    %c0_11 = arith.constant 0 : index
    %16 = vector.load %arg6[%c0_10, %c0_11] : memref<1x32xf32, #tpu.memory_space<vmem>>, vector<1x32xf32>
    %c0_12 = arith.constant 0 : index
    %c0_13 = arith.constant 0 : index
    %c0_14 = arith.constant 0 : index
    %17 = vector.load %arg7[%c0_12, %c0_13, %c0_14] : memref<1x1x32xf32, #tpu.memory_space<vmem>>, vector<1x1x32xf32>
    %18 = vector.shape_cast %17 : vector<1x1x32xf32> to vector<1x32xf32>
    %cst_15 = arith.constant dense<0.000000e+00> : vector<8x32xf32>
    %19 = tpu.matmul %14, %15, %cst_15 {dimension_numbers = #tpu.dot_dimension_numbers<[1], [0], [0], [1], [0, 0, 1, 1], [], []>} : vector<8x64xf32>, vector<64x32xf32>, vector<8x32xf32> -> vector<8x32xf32>
    %20 = vector.broadcast %1 : vector<8x1xf32> to vector<8x32xf32>
    %21 = vector.broadcast %16 : vector<1x32xf32> to vector<8x32xf32>
    %22 = arith.mulf %20, %21 : vector<8x32xf32>
    %23 = arith.addf %19, %22 : vector<8x32xf32>
    %24 = vector.broadcast %18 : vector<1x32xf32> to vector<8x32xf32>
    %25 = arith.addf %23, %24 : vector<8x32xf32>
    %cst_16 = arith.constant 0.000000e+00 : f32
    %26 = vector.broadcast %cst_16 : f32 to vector<8x32xf32>
    %27 = arith.cmpf oge, %25, %26 : vector<8x32xf32>
    %cst_17 = arith.constant 2.000000e-02 : f32
    %28 = vector.broadcast %cst_17 : f32 to vector<8x32xf32>
    %29 = arith.mulf %28, %25 : vector<8x32xf32>
    %30 = arith.select %27, %25, %29 : vector<8x32xi1>, vector<8x32xf32>
    %c0_18 = arith.constant 0 : index
    %c0_19 = arith.constant 0 : index
    %31 = vector.load %arg8[%c0_18, %c0_19] : memref<32x16xf32, #tpu.memory_space<vmem>>, vector<32x16xf32>
    %c0_20 = arith.constant 0 : index
    %c0_21 = arith.constant 0 : index
    %32 = vector.load %arg9[%c0_20, %c0_21] : memref<1x16xf32, #tpu.memory_space<vmem>>, vector<1x16xf32>
    %c0_22 = arith.constant 0 : index
    %c0_23 = arith.constant 0 : index
    %c0_24 = arith.constant 0 : index
    %33 = vector.load %arg10[%c0_22, %c0_23, %c0_24] : memref<1x1x16xf32, #tpu.memory_space<vmem>>, vector<1x1x16xf32>
    %34 = vector.shape_cast %33 : vector<1x1x16xf32> to vector<1x16xf32>
    %cst_25 = arith.constant dense<0.000000e+00> : vector<8x16xf32>
    %35 = tpu.matmul %30, %31, %cst_25 {dimension_numbers = #tpu.dot_dimension_numbers<[1], [0], [0], [1], [0, 0, 1, 1], [], []>} : vector<8x32xf32>, vector<32x16xf32>, vector<8x16xf32> -> vector<8x16xf32>
    %36 = vector.broadcast %1 : vector<8x1xf32> to vector<8x16xf32>
    %37 = vector.broadcast %32 : vector<1x16xf32> to vector<8x16xf32>
    %38 = arith.mulf %36, %37 : vector<8x16xf32>
    %39 = arith.addf %35, %38 : vector<8x16xf32>
    %40 = vector.broadcast %34 : vector<1x16xf32> to vector<8x16xf32>
    %41 = arith.addf %39, %40 : vector<8x16xf32>
    %cst_26 = arith.constant 0.000000e+00 : f32
    %42 = vector.broadcast %cst_26 : f32 to vector<8x16xf32>
    %43 = arith.cmpf oge, %41, %42 : vector<8x16xf32>
    %cst_27 = arith.constant 2.000000e-02 : f32
    %44 = vector.broadcast %cst_27 : f32 to vector<8x16xf32>
    %45 = arith.mulf %44, %41 : vector<8x16xf32>
    %46 = arith.select %43, %41, %45 : vector<8x16xi1>, vector<8x16xf32>
    %c0_28 = arith.constant 0 : index
    %c0_29 = arith.constant 0 : index
    %47 = vector.load %arg11[%c0_28, %c0_29] : memref<16x2xf32, #tpu.memory_space<vmem>>, vector<16x2xf32>
    %c0_30 = arith.constant 0 : index
    %c0_31 = arith.constant 0 : index
    %48 = vector.load %arg12[%c0_30, %c0_31] : memref<1x2xf32, #tpu.memory_space<vmem>>, vector<1x2xf32>
    %cst_32 = arith.constant dense<0.000000e+00> : vector<8x2xf32>
    %49 = tpu.matmul %46, %47, %cst_32 {dimension_numbers = #tpu.dot_dimension_numbers<[1], [0], [0], [1], [0, 0, 1, 1], [], []>} : vector<8x16xf32>, vector<16x2xf32>, vector<8x2xf32> -> vector<8x2xf32>
    %50 = vector.broadcast %48 : vector<1x2xf32> to vector<8x2xf32>
    %51 = arith.addf %49, %50 : vector<8x2xf32>
    %52 = math.tanh %51 : vector<8x2xf32>
    %c0_33 = arith.constant 0 : index
    %c0_34 = arith.constant 0 : index
    %c0_35 = arith.constant 0 : index
    %53 = vector.load %arg13[%c0_33, %c0_34, %c0_35] : memref<1x8x2xf32, #tpu.memory_space<vmem>>, vector<1x8x2xf32>
    %54 = vector.shape_cast %53 : vector<1x8x2xf32> to vector<8x2xf32>
    %55 = vector.shape_cast %52 : vector<8x2xf32> to vector<1x8x2xf32>
    tpu.vector_store %arg13[%c0_33, %c0_34, %c0_35], %55 {strides = array<i32>} : memref<1x8x2xf32, #tpu.memory_space<vmem>>, vector<1x8x2xf32>,
    return
  }
  func.func @transform_0(%arg0: i32, %arg1: i32) -> (i32, i32, i32) {
    %c0_i32 = arith.constant 0 : i32
    %c0_i32_0 = arith.constant 0 : i32
    return %arg0, %arg1, %c0_i32 : i32, i32, i32
  }
  func.func @transform_1(%arg0: i32, %arg1: i32) -> (i32, i32) {
    %c0_i32 = arith.constant 0 : i32
    %c0_i32_0 = arith.constant 0 : i32
    %c0_i32_1 = arith.constant 0 : i32
    return %c0_i32, %c0_i32_0 : i32, i32
  }
  func.func @transform_2(%arg0: i32, %arg1: i32) -> (i32, i32, i32) {
    %c0_i32 = arith.constant 0 : i32
    %c0_i32_0 = arith.constant 0 : i32
    %c0_i32_1 = arith.constant 0 : i32
    return %arg0, %c0_i32, %c0_i32_0 : i32, i32, i32
  }
  func.func @transform_3(%arg0: i32, %arg1: i32) -> (i32, i32) {
    %c0_i32 = arith.constant 0 : i32
    %c0_i32_0 = arith.constant 0 : i32
    %c0_i32_1 = arith.constant 0 : i32
    return %c0_i32, %c0_i32_0 : i32, i32
  }
  func.func @transform_4(%arg0: i32, %arg1: i32) -> (i32, i32) {
    %c0_i32 = arith.constant 0 : i32
    %c0_i32_0 = arith.constant 0 : i32
    %c0_i32_1 = arith.constant 0 : i32
    return %c0_i32, %c0_i32_0 : i32, i32
  }
  func.func @transform_5(%arg0: i32, %arg1: i32) -> (i32, i32, i32) {
    %c0_i32 = arith.constant 0 : i32
    %c0_i32_0 = arith.constant 0 : i32
    %c0_i32_1 = arith.constant 0 : i32
    return %arg0, %c0_i32, %c0_i32_0 : i32, i32, i32
  }
  func.func @transform_6(%arg0: i32, %arg1: i32) -> (i32, i32) {
    %c0_i32 = arith.constant 0 : i32
    %c0_i32_0 = arith.constant 0 : i32
    %c0_i32_1 = arith.constant 0 : i32
    return %c0_i32, %c0_i32_0 : i32, i32
  }
  func.func @transform_7(%arg0: i32, %arg1: i32) -> (i32, i32) {
    %c0_i32 = arith.constant 0 : i32
    %c0_i32_0 = arith.constant 0 : i32
    %c0_i32_1 = arith.constant 0 : i32
    return %c0_i32, %c0_i32_0 : i32, i32
  }
  func.func @transform_8(%arg0: i32, %arg1: i32) -> (i32, i32, i32) {
    %c0_i32 = arith.constant 0 : i32
    %c0_i32_0 = arith.constant 0 : i32
    %c0_i32_1 = arith.constant 0 : i32
    return %arg0, %c0_i32, %c0_i32_0 : i32, i32, i32
  }
  func.func @transform_9(%arg0: i32, %arg1: i32) -> (i32, i32) {
    %c0_i32 = arith.constant 0 : i32
    %c0_i32_0 = arith.constant 0 : i32
    %c0_i32_1 = arith.constant 0 : i32
    return %c0_i32, %c0_i32_0 : i32, i32
  }
  func.func @transform_10(%arg0: i32, %arg1: i32) -> (i32, i32) {
    %c0_i32 = arith.constant 0 : i32
    %c0_i32_0 = arith.constant 0 : i32
    %c0_i32_1 = arith.constant 0 : i32
    return %c0_i32, %c0_i32_0 : i32, i32
  }
  func.func @transform_11(%arg0: i32, %arg1: i32) -> (i32, i32, i32) {
    %c0_i32 = arith.constant 0 : i32
    %c0_i32_0 = arith.constant 0 : i32
    return %arg0, %arg1, %c0_i32 : i32, i32, i32
  }
}

</mosaic_0001>

<llo_original>
// kernel: tpu_custom_call.1
$region0: #{tpu_custom_call.1}
  #allocation0 [shape = 'u32[]', space=smem, size = 0x4, offset = 0x4, fixed_abs, tag = 'smem constant byte address 0x4 - core index']
  #allocation1 [shape = 'u32[72,128]{1,0:T(1,128)}', space=vmem, size = 0x9000, scoped, tag = 'internal scratch']
  %s0 = inlined_call_operand.vmem [shape: f32[2,8,1], index: 0, kind: input, shape index: {}]
  %s1 = inlined_call_operand.vmem [shape: f32[1,64], index: 1, kind: input, shape index: {}]
  %s2 = inlined_call_operand.vmem [shape: f32[2,1,64], index: 2, kind: input, shape index: {}]
  %s3 = inlined_call_operand.vmem [shape: f32[64,32], index: 3, kind: input, shape index: {}]
  %s4 = inlined_call_operand.vmem [shape: f32[1,32], index: 4, kind: input, shape index: {}]
  %s5 = inlined_call_operand.vmem [shape: f32[2,1,32], index: 5, kind: input, shape index: {}]
  %s6 = inlined_call_operand.vmem [shape: f32[32,16], index: 6, kind: input, shape index: {}]
  %s7 = inlined_call_operand.vmem [shape: f32[1,16], index: 7, kind: input, shape index: {}]
  %s8 = inlined_call_operand.vmem [shape: f32[2,1,16], index: 8, kind: input, shape index: {}]
  %s9 = inlined_call_operand.vmem [shape: f32[16,2], index: 9, kind: input, shape index: {}]
  %s10 = inlined_call_operand.vmem [shape: f32[1,2], index: 10, kind: input, shape index: {}]
  %s11 = inlined_call_operand.vmem [shape: f32[2,8,2], index: 11, kind: output, shape index: {}]
  %s12 = sld [smem:[#allocation0]]
  $region77: #{tpu_custom_call.1} parent=0
    _
  %s14 = ssub.s32 1, %s12
  %s15 = scalar_select 0, %s14, %s12
  loop: start=0, step=1, limit=4
  $region2: #{tpu_custom_call.1} parent=0 // loop_pre_header
    _
  $region3: #{tpu_custom_call.1} parent=0 // loop_header
    %s17 = sphi 0, %s21
    %p18 = scmp.ge.s32.totalorder %s17, 4
    %s24 = sphi 0, %s36
    %s25 = sphi 0, %s32
    %s26 = sphi 0, %s24
    %s27 = sphi 0, %s25
    %s28 = sphi 0, %s26
    %s29 = sphi 0, %s27
    %s41 = sphi 0, %s43
    %s44 = sphi 0, %s41
    %s45 = sphi 0, %s44
    %s61 = sphi 0, %s45
    %s65 = sphi 0, %s65
    %s67 = sphi 0, %s65
    %s68 = sphi 0, %s67
    %s82 = sphi 0, %s68
    %s88 = sphi 0, %s90
    %s91 = sphi 0, %s88
    %s92 = sphi 0, %s91
    %s108 = sphi 0, %s92
    %s112 = sphi 0, %s112
    %s114 = sphi 0, %s112
    %s115 = sphi 0, %s114
    %s129 = sphi 0, %s115
    %s133 = sphi 0, %s133
    %s135 = sphi 0, %s133
    %s136 = sphi 0, %s135
    %s150 = sphi 0, %s136
    %s156 = sphi 0, %s158
    %s159 = sphi 0, %s156
    %s160 = sphi 0, %s159
    %s176 = sphi 0, %s160
    %s180 = sphi 0, %s180
    %s182 = sphi 0, %s180
    %s183 = sphi 0, %s182
    %s197 = sphi 0, %s183
    %s201 = sphi 0, %s201
    %s203 = sphi 0, %s201
    %s204 = sphi 0, %s203
    %s218 = sphi 0, %s204
    %s224 = sphi 0, %s226
    %s227 = sphi 0, %s224
    %s228 = sphi 0, %s227
    %s244 = sphi 0, %s228
    %s248 = sphi 0, %s248
    %s250 = sphi 0, %s248
    %s251 = sphi 0, %s250
    %s265 = sphi 0, %s251
    %s269 = sphi 0, %s269
    %s271 = sphi 0, %s269
    %s272 = sphi 0, %s271
    %s286 = sphi 0, %s272
    %s294 = sphi 0, %s296
    %s297 = sphi 0, %s294
    %s298 = sphi 0, %s297
    %s314 = sphi 0, %s298
  $region4: #{tpu_custom_call.1} parent=0 // loop_header_branch
    %20 = sbr.rel (%p18) target = $region8
  $region5: #{tpu_custom_call.1} parent=0 // loop_body
    %s22 = ssub.s32 %s17, 1
    %s23 = ssub.s32 %s17, 2
    %s30 = sadd.s32 1, %s25
    %p31 = scmp.ge.s32.totalorder %s30, 1
    %s32 = scalar_select %p31, 0, %s30
    %s33 = sadd.s32 1, %s24
    %s34 = scalar_select %p31, %s33, %s24
    %p35 = scmp.ge.s32.totalorder %s34, 2
    %s36 = scalar_select %p35, 0, %s34
    %s37 = ssub.s32 %s24, %s36
    %s38 = ssub.s32 %s25, %s32
    %s39 = sor.u32 %s37, %s38
    %p40 = scmp.eq.s32.totalorder %s39, 0
    %s42 = sadd.s32 %s41, 1
    %s43 = scalar_select %p40, %s41, %s42
    %p46 = pneg %p40
    %p47 = scmp.eq.s32.totalorder %s17, 1
    %p48 = por %p46, %p47
    %p49 = scmp.ne.s32.totalorder %s41, %s44
    %p50 = scmp.eq.s32.totalorder %s17, 0
    %p51 = por %p49, %p50
    %p52 = scmp.ne.s32.totalorder %s41, %s44
    %p53 = scmp.eq.s32.totalorder %s22, 1
    %p54 = por %p52, %p53
    %p55 = scmp.ne.s32.totalorder %s44, %s45
    %p56 = scmp.eq.s32.totalorder %s22, 0
    %p57 = por %p55, %p56
    %p58 = scmp.ne.s32.totalorder %s44, %s45
    %p59 = scmp.eq.s32.totalorder %s23, 1
    %p60 = por %p58, %p59
    %p62 = scmp.ne.s32.totalorder %s45, %s61
    %p63 = scmp.eq.s32.totalorder %s23, 0
    %p64 = por %p62, %p63
    %s66 = sadd.s32 %s65, 1
    %p69 = scmp.eq.s32.totalorder %s17, 1
    %p70 = scmp.ne.s32.totalorder %s65, %s67
    %p71 = scmp.eq.s32.totalorder %s17, 0
    %p72 = por %p70, %p71
    %p73 = scmp.ne.s32.totalorder %s65, %s67
    %p74 = scmp.eq.s32.totalorder %s22, 1
    %p75 = por %p73, %p74
    %p76 = scmp.ne.s32.totalorder %s67, %s68
    %p77 = scmp.eq.s32.totalorder %s22, 0
    %p78 = por %p76, %p77
    %p79 = scmp.ne.s32.totalorder %s67, %s68
    %p80 = scmp.eq.s32.totalorder %s23, 1
    %p81 = por %p79, %p80
    %p83 = scmp.ne.s32.totalorder %s68, %s82
    %p84 = scmp.eq.s32.totalorder %s23, 0
    %p85 = por %p83, %p84
    %s86 = ssub.s32 %s24, %s36
    %p87 = scmp.eq.s32.totalorder %s86, 0
    %s89 = sadd.s32 %s88, 1
    %s90 = scalar_select %p87, %s88, %s89
    %p93 = pneg %p87
    %p94 = scmp.eq.s32.totalorder %s17, 1
    %p95 = por %p93, %p94
    %p96 = scmp.ne.s32.totalorder %s88, %s91
    %p97 = scmp.eq.s32.totalorder %s17, 0
    %p98 = por %p96, %p97
    %p99 = scmp.ne.s32.totalorder %s88, %s91
    %p100 = scmp.eq.s32.totalorder %s22, 1
    %p101 = por %p99, %p100
    %p102 = scmp.ne.s32.totalorder %s91, %s92
    %p103 = scmp.eq.s32.totalorder %s22, 0
    %p104 = por %p102, %p103
    %p105 = scmp.ne.s32.totalorder %s91, %s92
    %p106 = scmp.eq.s32.totalorder %s23, 1
    %p107 = por %p105, %p106
    %p109 = scmp.ne.s32.totalorder %s92, %s108
    %p110 = scmp.eq.s32.totalorder %s23, 0
    %p111 = por %p109, %p110
    %s113 = sadd.s32 %s112, 1
    %p116 = scmp.eq.s32.totalorder %s17, 1
    %p117 = scmp.ne.s32.totalorder %s112, %s114
    %p118 = scmp.eq.s32.totalorder %s17, 0
    %p119 = por %p117, %p118
    %p120 = scmp.ne.s32.totalorder %s112, %s114
    %p121 = scmp.eq.s32.totalorder %s22, 1
    %p122 = por %p120, %p121
    %p123 = scmp.ne.s32.totalorder %s114, %s115
    %p124 = scmp.eq.s32.totalorder %s22, 0
    %p125 = por %p123, %p124
    %p126 = scmp.ne.s32.totalorder %s114, %s115
    %p127 = scmp.eq.s32.totalorder %s23, 1
    %p128 = por %p126, %p127
    %p130 = scmp.ne.s32.totalorder %s115, %s129
    %p131 = scmp.eq.s32.totalorder %s23, 0
    %p132 = por %p130, %p131
    %s134 = sadd.s32 %s133, 1
    %p137 = scmp.eq.s32.totalorder %s17, 1
    %p138 = scmp.ne.s32.totalorder %s133, %s135
    %p139 = scmp.eq.s32.totalorder %s17, 0
    %p140 = por %p138, %p139
    %p141 = scmp.ne.s32.totalorder %s133, %s135
    %p142 = scmp.eq.s32.totalorder %s22, 1
    %p143 = por %p141, %p142
    %p144 = scmp.ne.s32.totalorder %s135, %s136
    %p145 = scmp.eq.s32.totalorder %s22, 0
    %p146 = por %p144, %p145
    %p147 = scmp.ne.s32.totalorder %s135, %s136
    %p148 = scmp.eq.s32.totalorder %s23, 1
    %p149 = por %p147, %p148
    %p151 = scmp.ne.s32.totalorder %s136, %s150
    %p152 = scmp.eq.s32.totalorder %s23, 0
    %p153 = por %p151, %p152
    %s154 = ssub.s32 %s24, %s36
    %p155 = scmp.eq.s32.totalorder %s154, 0
    %s157 = sadd.s32 %s156, 1
    %s158 = scalar_select %p155, %s156, %s157
    %p161 = pneg %p155
    %p162 = scmp.eq.s32.totalorder %s17, 1
    %p163 = por %p161, %p162
    %p164 = scmp.ne.s32.totalorder %s156, %s159
    %p165 = scmp.eq.s32.totalorder %s17, 0
    %p166 = por %p164, %p165
    %p167 = scmp.ne.s32.totalorder %s156, %s159
    %p168 = scmp.eq.s32.totalorder %s22, 1
    %p169 = por %p167, %p168
    %p170 = scmp.ne.s32.totalorder %s159, %s160
    %p171 = scmp.eq.s32.totalorder %s22, 0
    %p172 = por %p170, %p171
    %p173 = scmp.ne.s32.totalorder %s159, %s160
    %p174 = scmp.eq.s32.totalorder %s23, 1
    %p175 = por %p173, %p174
    %p177 = scmp.ne.s32.totalorder %s160, %s176
    %p178 = scmp.eq.s32.totalorder %s23, 0
    %p179 = por %p177, %p178
    %s181 = sadd.s32 %s180, 1
    %p184 = scmp.eq.s32.totalorder %s17, 1
    %p185 = scmp.ne.s32.totalorder %s180, %s182
    %p186 = scmp.eq.s32.totalorder %s17, 0
    %p187 = por %p185, %p186
    %p188 = scmp.ne.s32.totalorder %s180, %s182
    %p189 = scmp.eq.s32.totalorder %s22, 1
    %p190 = por %p188, %p189
    %p191 = scmp.ne.s32.totalorder %s182, %s183
    %p192 = scmp.eq.s32.totalorder %s22, 0
    %p193 = por %p191, %p192
    %p194 = scmp.ne.s32.totalorder %s182, %s183
    %p195 = scmp.eq.s32.totalorder %s23, 1
    %p196 = por %p194, %p195
    %p198 = scmp.ne.s32.totalorder %s183, %s197
    %p199 = scmp.eq.s32.totalorder %s23, 0
    %p200 = por %p198, %p199
    %s202 = sadd.s32 %s201, 1
    %p205 = scmp.eq.s32.totalorder %s17, 1
    %p206 = scmp.ne.s32.totalorder %s201, %s203
    %p207 = scmp.eq.s32.totalorder %s17, 0
    %p208 = por %p206, %p207
    %p209 = scmp.ne.s32.totalorder %s201, %s203
    %p210 = scmp.eq.s32.totalorder %s22, 1
    %p211 = por %p209, %p210
    %p212 = scmp.ne.s32.totalorder %s203, %s204
    %p213 = scmp.eq.s32.totalorder %s22, 0
    %p214 = por %p212, %p213
    %p215 = scmp.ne.s32.totalorder %s203, %s204
    %p216 = scmp.eq.s32.totalorder %s23, 1
    %p217 = por %p215, %p216
    %p219 = scmp.ne.s32.totalorder %s204, %s218
    %p220 = scmp.eq.s32.totalorder %s23, 0
    %p221 = por %p219, %p220
    %s222 = ssub.s32 %s24, %s36
    %p223 = scmp.eq.s32.totalorder %s222, 0
    %s225 = sadd.s32 %s224, 1
    %s226 = scalar_select %p223, %s224, %s225
    %p229 = pneg %p223
    %p230 = scmp.eq.s32.totalorder %s17, 1
    %p231 = por %p229, %p230
    %p232 = scmp.ne.s32.totalorder %s224, %s227
    %p233 = scmp.eq.s32.totalorder %s17, 0
    %p234 = por %p232, %p233
    %p235 = scmp.ne.s32.totalorder %s224, %s227
    %p236 = scmp.eq.s32.totalorder %s22, 1
    %p237 = por %p235, %p236
    %p238 = scmp.ne.s32.totalorder %s227, %s228
    %p239 = scmp.eq.s32.totalorder %s22, 0
    %p240 = por %p238, %p239
    %p241 = scmp.ne.s32.totalorder %s227, %s228
    %p242 = scmp.eq.s32.totalorder %s23, 1
    %p243 = por %p241, %p242
    %p245 = scmp.ne.s32.totalorder %s228, %s244
    %p246 = scmp.eq.s32.totalorder %s23, 0
    %p247 = por %p245, %p246
    %s249 = sadd.s32 %s248, 1
    %p252 = scmp.eq.s32.totalorder %s17, 1
    %p253 = scmp.ne.s32.totalorder %s248, %s250
    %p254 = scmp.eq.s32.totalorder %s17, 0
    %p255 = por %p253, %p254
    %p256 = scmp.ne.s32.totalorder %s248, %s250
    %p257 = scmp.eq.s32.totalorder %s22, 1
    %p258 = por %p256, %p257
    %p259 = scmp.ne.s32.totalorder %s250, %s251
    %p260 = scmp.eq.s32.totalorder %s22, 0
    %p261 = por %p259, %p260
    %p262 = scmp.ne.s32.totalorder %s250, %s251
    %p263 = scmp.eq.s32.totalorder %s23, 1
    %p264 = por %p262, %p263
    %p266 = scmp.ne.s32.totalorder %s251, %s265
    %p267 = scmp.eq.s32.totalorder %s23, 0
    %p268 = por %p266, %p267
    %s270 = sadd.s32 %s269, 1
    %p273 = scmp.eq.s32.totalorder %s17, 1
    %p274 = scmp.ne.s32.totalorder %s269, %s271
    %p275 = scmp.eq.s32.totalorder %s17, 0
    %p276 = por %p274, %p275
    %p277 = scmp.ne.s32.totalorder %s269, %s271
    %p278 = scmp.eq.s32.totalorder %s22, 1
    %p279 = por %p277, %p278
    %p280 = scmp.ne.s32.totalorder %s271, %s272
    %p281 = scmp.eq.s32.totalorder %s22, 0
    %p282 = por %p280, %p281
    %p283 = scmp.ne.s32.totalorder %s271, %s272
    %p284 = scmp.eq.s32.totalorder %s23, 1
    %p285 = por %p283, %p284
    %p287 = scmp.ne.s32.totalorder %s272, %s286
    %p288 = scmp.eq.s32.totalorder %s23, 0
    %p289 = por %p287, %p288
    %s290 = ssub.s32 %s24, %s36
    %s291 = ssub.s32 %s25, %s32
    %s292 = sor.u32 %s290, %s291
    %p293 = scmp.eq.s32.totalorder %s292, 0
    %s295 = sadd.s32 %s294, 1
    %s296 = scalar_select %p293, %s294, %s295
    %p299 = pneg %p293
    %p300 = scmp.eq.s32.totalorder %s17, 1
    %p301 = por %p299, %p300
    %p302 = scmp.ne.s32.totalorder %s294, %s297
    %p303 = scmp.eq.s32.totalorder %s17, 0
    %p304 = por %p302, %p303
    %p305 = scmp.ne.s32.totalorder %s294, %s297
    %p306 = scmp.eq.s32.totalorder %s22, 1
    %p307 = por %p305, %p306
    %p308 = scmp.ne.s32.totalorder %s297, %s298
    %p309 = scmp.eq.s32.totalorder %s22, 0
    %p310 = por %p308, %p309
    %p311 = scmp.ne.s32.totalorder %s297, %s298
    %p312 = scmp.eq.s32.totalorder %s23, 1
    %p313 = por %p311, %p312
    %p315 = scmp.ne.s32.totalorder %s298, %s314
    %p316 = scmp.eq.s32.totalorder %s23, 0
    %p317 = por %p315, %p316
    %p318 = scmp.le.s32.totalorder 1, %s17
    %p319 = scmp.lt.s32.totalorder %s17, 3
    %p320 = pnand %p318, %p319
    %p321 = pneg %p320
    // Predicated region
    $region9: #{tpu_custom_call.1} parent=5 // pred_check
      _
    $region10: #{tpu_custom_call.1} parent=5 // pred_check_branch
      %323 = sbr.rel (%p320) target = $region12
    $region11: #{tpu_custom_call.1} parent=5 // pred_region
      %s324 = ssub.s32 %s17, 1
      // Predicated region
      $region13: #{tpu_custom_call.1} parent=11 // pred_check
        %p325 = pneg %p78
      $region14: #{tpu_custom_call.1} parent=11 // pred_check_branch
        %327 = sbr.rel (%p325) target = $region16
      $region15: #{tpu_custom_call.1} parent=11 // pred_region
        _
      $region16: #{tpu_custom_call.1} parent=11 // pred_fallthru
        _
      // Predicated region
      $region17: #{tpu_custom_call.1} parent=11 // pred_check
        %p328 = pneg %p125
      $region18: #{tpu_custom_call.1} parent=11 // pred_check_branch
        %330 = sbr.rel (%p328) target = $region20
      $region19: #{tpu_custom_call.1} parent=11 // pred_region
        _
      $region20: #{tpu_custom_call.1} parent=11 // pred_fallthru
        _
      // Predicated region
      $region21: #{tpu_custom_call.1} parent=11 // pred_check
        %p331 = pneg %p146
      $region22: #{tpu_custom_call.1} parent=11 // pred_check_branch
        %333 = sbr.rel (%p331) target = $region24
      $region23: #{tpu_custom_call.1} parent=11 // pred_region
        _
      $region24: #{tpu_custom_call.1} parent=11 // pred_fallthru
        _
      // Predicated region
      $region25: #{tpu_custom_call.1} parent=11 // pred_check
        %p334 = pneg %p193
      $region26: #{tpu_custom_call.1} parent=11 // pred_check_branch
        %336 = sbr.rel (%p334) target = $region28
      $region27: #{tpu_custom_call.1} parent=11 // pred_region
        _
      $region28: #{tpu_custom_call.1} parent=11 // pred_fallthru
        _
      // Predicated region
      $region29: #{tpu_custom_call.1} parent=11 // pred_check
        %p337 = pneg %p214
      $region30: #{tpu_custom_call.1} parent=11 // pred_check_branch
        %339 = sbr.rel (%p337) target = $region32
      $region31: #{tpu_custom_call.1} parent=11 // pred_region
        _
      $region32: #{tpu_custom_call.1} parent=11 // pred_fallthru
        _
      // Predicated region
      $region33: #{tpu_custom_call.1} parent=11 // pred_check
        %p340 = pneg %p261
      $region34: #{tpu_custom_call.1} parent=11 // pred_check_branch
        %342 = sbr.rel (%p340) target = $region36
      $region35: #{tpu_custom_call.1} parent=11 // pred_region
        _
      $region36: #{tpu_custom_call.1} parent=11 // pred_fallthru
        _
      // Predicated region
      $region37: #{tpu_custom_call.1} parent=11 // pred_check
        %p343 = pneg %p282
      $region38: #{tpu_custom_call.1} parent=11 // pred_check_branch
        %345 = sbr.rel (%p343) target = $region40
      $region39: #{tpu_custom_call.1} parent=11 // pred_region
        _
      $region40: #{tpu_custom_call.1} parent=11 // pred_fallthru
        _
    $region12: #{tpu_custom_call.1} parent=5 // pred_fallthru
      _
    %p346 = scmp.lt.s32.totalorder %s17, 2
    // Predicated region
    $region41: #{tpu_custom_call.1} parent=5 // pred_check
      %p347 = pneg %p346
    $region42: #{tpu_custom_call.1} parent=5 // pred_check_branch
      %349 = sbr.rel (%p347) target = $region44
    $region43: #{tpu_custom_call.1} parent=5 // pred_region
      // Predicated region
      $region45: #{tpu_custom_call.1} parent=43 // pred_check
        %p350 = pneg %p51
      $region46: #{tpu_custom_call.1} parent=43 // pred_check_branch
        %352 = sbr.rel (%p350) target = $region48
      $region47: #{tpu_custom_call.1} parent=43 // pred_region
        %p353 = scmp.lt.s32.totalorder %s24, 1
        %s354 = scalar_select %p353, %s24, 1
        %p355 = scmp.lt.s32.totalorder %s25, 0
        %s356 = scalar_select %p355, %s25, 0
        %s357 = sadd.s32 %s356, %s354
        %s358 = smul.addr %s357, 8
        %s359 = scalar_lea.vmem %s0, %s358
      $region48: #{tpu_custom_call.1} parent=43 // pred_fallthru
        _
      // Predicated region
      $region49: #{tpu_custom_call.1} parent=43 // pred_check
        %p360 = pneg %p98
      $region50: #{tpu_custom_call.1} parent=43 // pred_check_branch
        %362 = sbr.rel (%p360) target = $region52
      $region51: #{tpu_custom_call.1} parent=43 // pred_region
        %p363 = scmp.lt.s32.totalorder %s24, 1
        %s364 = scalar_select %p363, %s24, 1
        %s365 = scalar_lea.vmem %s2, %s364
      $region52: #{tpu_custom_call.1} parent=43 // pred_fallthru
        _
      // Predicated region
      $region53: #{tpu_custom_call.1} parent=43 // pred_check
        %p366 = pneg %p166
      $region54: #{tpu_custom_call.1} parent=43 // pred_check_branch
        %368 = sbr.rel (%p366) target = $region56
      $region55: #{tpu_custom_call.1} parent=43 // pred_region
        %p369 = scmp.lt.s32.totalorder %s24, 1
        %s370 = scalar_select %p369, %s24, 1
        %s371 = scalar_lea.vmem %s5, %s370
      $region56: #{tpu_custom_call.1} parent=43 // pred_fallthru
        _
      // Predicated region
      $region57: #{tpu_custom_call.1} parent=43 // pred_check
        %p372 = pneg %p234
      $region58: #{tpu_custom_call.1} parent=43 // pred_check_branch
        %374 = sbr.rel (%p372) target = $region60
      $region59: #{tpu_custom_call.1} parent=43 // pred_region
        %p375 = scmp.lt.s32.totalorder %s24, 1
        %s376 = scalar_select %p375, %s24, 1
        %s377 = scalar_lea.vmem %s8, %s376
      $region60: #{tpu_custom_call.1} parent=43 // pred_fallthru
        _
    $region44: #{tpu_custom_call.1} parent=5 // pred_fallthru
      _
    %p378 = scmp.le.s32.totalorder 1, %s17
    %p379 = scmp.lt.s32.totalorder %s17, 3
    %p380 = pnand %p378, %p379
    %p381 = pneg %p380
    // Predicated region
    $region61: #{tpu_custom_call.1} parent=5 // pred_check
      _
    $region62: #{tpu_custom_call.1} parent=5 // pred_check_branch
      %383 = sbr.rel (%p380) target = $region64
    $region63: #{tpu_custom_call.1} parent=5 // pred_region
      %s384 = ssub.s32 %s17, 1
      %p385 = scmp.lt.s32.totalorder %s26, 1
      %s386 = scalar_select %p385, %s26, 1
      %p387 = scmp.lt.s32.totalorder %s27, 0
      %s388 = scalar_select %p387, %s27, 0
      %s389 = sadd.s32 %s388, %s386
      %s390 = smul.addr %s389, 8
      %s391 = scalar_lea.vmem %s0, %s390
      %p392 = pneg %p57
      %p393 = pneg %p54
      %p394 = pneg %p78
      %p395 = pneg %p75
      %p396 = scmp.lt.s32.totalorder %s26, 1
      %s397 = scalar_select %p396, %s26, 1
      %s398 = scalar_lea.vmem %s2, %s397
      %p399 = pneg %p104
      %p400 = pneg %p101
      %p401 = pneg %p125
      %p402 = pneg %p122
      %p403 = pneg %p146
      %p404 = pneg %p143
      %p405 = scmp.lt.s32.totalorder %s26, 1
      %s406 = scalar_select %p405, %s26, 1
      %s407 = scalar_lea.vmem %s5, %s406
      %p408 = pneg %p172
      %p409 = pneg %p169
      %p410 = pneg %p193
      %p411 = pneg %p190
      %p412 = pneg %p214
      %p413 = pneg %p211
      %p414 = scmp.lt.s32.totalorder %s26, 1
      %s415 = scalar_select %p414, %s26, 1
      %s416 = scalar_lea.vmem %s8, %s415
      %p417 = pneg %p240
      %p418 = pneg %p237
      %p419 = pneg %p261
      %p420 = pneg %p258
      %p421 = pneg %p282
      %p422 = pneg %p279
      %p423 = pneg %p310
      %p424 = pneg %p307
      %p425 = scmp.lt.s32.totalorder %s26, 1
      %s426 = scalar_select %p425, %s26, 1
      %p427 = scmp.lt.s32.totalorder %s27, 0
      %s428 = scalar_select %p427, %s27, 0
      %s429 = sadd.s32 %s428, %s426
      %s430 = smul.addr %s429, 8
      %s431 = scalar_lea.vmem %s11, %s430
      %p432 = scmp.lt.s32.totalorder %s26, 1
      %s433 = scalar_select %p432, %s26, 1
      %p434 = scmp.lt.s32.totalorder %s27, 0
      %s435 = scalar_select %p434, %s27, 0
      %s436 = sadd.s32 %s435, %s433
      %s437 = smul.addr %s436, 8
      %s438 = scalar_lea.vmem %s0, %s437
      %p439 = scmp.lt.s32.totalorder %s26, 1
      %s440 = scalar_select %p439, %s26, 1
      %s441 = scalar_lea.vmem %s2, %s440
      %p442 = scmp.lt.s32.totalorder %s26, 1
      %s443 = scalar_select %p442, %s26, 1
      %s444 = scalar_lea.vmem %s5, %s443
      %p445 = scmp.lt.s32.totalorder %s26, 1
      %s446 = scalar_select %p445, %s26, 1
      %s447 = scalar_lea.vmem %s8, %s446
      %p448 = scmp.lt.s32.totalorder %s26, 1
      %s449 = scalar_select %p448, %s26, 1
      %p450 = scmp.lt.s32.totalorder %s27, 0
      %s451 = scalar_select %p450, %s27, 0
      %s452 = sadd.s32 %s451, %s449
      %s453 = smul.addr %s452, 8
      %s454 = scalar_lea.vmem %s11, %s453
      %v455 = vld [vmem:[%s438] sm:$0xff]
      %v456 = vld [vmem:[%s1] sm:$0x1]
      %v457 = vld [vmem:[%s441] sm:$0x1]
      %459 = vset.pattern.permute.xlu0 0
      %460 = vperm.xlu0 %459, %v455
      %v461 = vpop.permute.xlu0 %460
      %v464 = vperm.slane %v456, 0
      %v466 = vmul.f32 %v461, %v464
      %v468 = vperm.slane %v457, 0
      %v470 = vadd.f32 %v466, %v468
      %vm471 = vcmp.ge.f32.partialorder %v470, 0.0
      %v472 = vmul.f32 %v470, 0.02
      %v473 = vsel %vm471, %v470, %v472
      %v474 = vld [vmem:[%s3] sm:$0xff]
      %v475 = vld [vmem:[%s3 + $0x8] sm:$0xff]
      %v476 = vld [vmem:[%s3 + $0x10] sm:$0xff]
      %v477 = vld [vmem:[%s3 + $0x18] sm:$0xff]
      %v478 = vld [vmem:[%s3 + $0x20] sm:$0xff]
      %v479 = vld [vmem:[%s3 + $0x28] sm:$0xff]
      %v480 = vld [vmem:[%s3 + $0x30] sm:$0xff]
      %v481 = vld [vmem:[%s3 + $0x38] sm:$0xff]
      %v482 = vld [vmem:[%s4] sm:$0x1]
      %v483 = vld [vmem:[%s444] sm:$0x1]
      %v485 = vperm.slane %v482, 0
      %v487 = vmul.f32 %v461, %v485
      %vm488 = vcmask 523264
      %v490 = vsel %vm488, %v473, 0
      %492 = vmatpush.msra.mxu0 0.0
      %493 = vmatpush.msra.mxu0 0.0
      %494 = vmatpush.msra.mxu0 0.0
      %495 = vmatpush.msra.mxu0 0.0
      %496 = vmatpush.msra.mxu0 0.0
      %497 = vmatpush.msra.mxu0 0.0
      %498 = vmatpush.msra.mxu0 0.0
      %499 = vmatpush.msra.mxu0 0.0
      %500 = vmatpush.msra.mxu0 %v481
      %501 = vmatpush.msra.mxu0 %v480
      %502 = vmatpush.msra.mxu0 %v479
      %503 = vmatpush.msra.mxu0 %v478
      %504 = vmatpush.msra.mxu0 %v477
      %505 = vmatpush.msra.mxu0 %v476
      %506 = vmatpush.msra.mxu0 %v475
      %507 = vmatpush.msra.mxu0 %v474
      %508 = vmatmul.f32.gmra.mxu0 %v490
      %v509 = vpop.f32.mrf.mxu0
      %v510 = vadd.f32 %v487, %v509
      %511 = vdwg.mxu0
      %v513 = vperm.slane %v483, 0
      %v515 = vadd.f32 %v510, %v513
      %vm516 = vcmp.ge.f32.partialorder %v515, 0.0
      %v517 = vmul.f32 %v515, 0.02
      %v518 = vsel %vm516, %v515, %v517
      %v519 = vld [vmem:[%s6] sm:$0xff]
      %v520 = vld [vmem:[%s6 + $0x8] sm:$0xff]
      %v521 = vld [vmem:[%s6 + $0x10] sm:$0xff]
      %v522 = vld [vmem:[%s6 + $0x18] sm:$0xff]
      %v523 = vld [vmem:[%s7] sm:$0x1]
      %v524 = vld [vmem:[%s447] sm:$0x1]
      %v526 = vperm.slane %v523, 0
      %v528 = vmul.f32 %v461, %v526
      %vm529 = vcmask 261120
      %v531 = vsel %vm529, %v518, 0
      %533 = vmatpush.msra.mxu0 0.0
      %534 = vmatpush.msra.mxu0 0.0
      %535 = vmatpush.msra.mxu0 0.0
      %536 = vmatpush.msra.mxu0 0.0
      %537 = vmatpush.msra.mxu0 0.0
      %538 = vmatpush.msra.mxu0 0.0
      %539 = vmatpush.msra.mxu0 0.0
      %540 = vmatpush.msra.mxu0 0.0
      %541 = vmatpush.msra.mxu0 0.0
      %542 = vmatpush.msra.mxu0 0.0
      %543 = vmatpush.msra.mxu0 0.0
      %544 = vmatpush.msra.mxu0 0.0
      %545 = vmatpush.msra.mxu0 %v522
      %546 = vmatpush.msra.mxu0 %v521
      %547 = vmatpush.msra.mxu0 %v520
      %548 = vmatpush.msra.mxu0 %v519
      %549 = vmatmul.f32.gmra.mxu0 %v531
      %v550 = vpop.f32.mrf.mxu0
      %v551 = vadd.f32 %v528, %v550
      %552 = vdwg.mxu0
      %v554 = vperm.slane %v524, 0
      %v556 = vadd.f32 %v551, %v554
      %vm557 = vcmp.ge.f32.partialorder %v556, 0.0
      %v558 = vmul.f32 %v556, 0.02
      %v559 = vsel %vm557, %v556, %v558
      %v560 = vld [vmem:[%s9] sm:$0xff]
      %v561 = vld [vmem:[%s9 + $0x8] sm:$0xff]
      %v562 = vld [vmem:[%s10] sm:$0x1]
      %v564 = vperm.slane %v562, 0
      %vm566 = vcmask 130048
      %v568 = vsel %vm566, %v559, 0
      %570 = vmatpush.msra.mxu0 0.0
      %571 = vmatpush.msra.mxu0 0.0
      %572 = vmatpush.msra.mxu0 0.0
      %573 = vmatpush.msra.mxu0 0.0
      %574 = vmatpush.msra.mxu0 0.0
      %575 = vmatpush.msra.mxu0 0.0
      %576 = vmatpush.msra.mxu0 0.0
      %577 = vmatpush.msra.mxu0 0.0
      %578 = vmatpush.msra.mxu0 0.0
      %579 = vmatpush.msra.mxu0 0.0
      %580 = vmatpush.msra.mxu0 0.0
      %581 = vmatpush.msra.mxu0 0.0
      %582 = vmatpush.msra.mxu0 0.0
      %583 = vmatpush.msra.mxu0 0.0
      %584 = vmatpush.msra.mxu0 %v561
      %585 = vmatpush.msra.mxu0 %v560
      %586 = vmatmul.f32.gmra.mxu0 %v568
      %v587 = vpop.f32.mrf.mxu0
      %v588 = vadd.f32 %v564, %v587
      %589 = vdwg.mxu0
      %v590 = vtanh.pop %v588
      %vm591 = vcmask 15360
      %592 = vst.msk [vmem:[%s454] sm:$0xff] %vm591, %v590
      %p593 = scmp.lt.s32.totalorder %s26, 1
      %s594 = scalar_select %p593, %s26, 1
      %p595 = scmp.lt.s32.totalorder %s27, 0
      %s596 = scalar_select %p595, %s27, 0
      %s597 = sadd.s32 %s596, %s594
      %s598 = smul.addr %s597, 8
      %s599 = scalar_lea.vmem %s11, %s598
      // Predicated region
      $region65: #{tpu_custom_call.1} parent=63 // pred_check
        %p600 = pneg %p307
      $region66: #{tpu_custom_call.1} parent=63 // pred_check_branch
        %602 = sbr.rel (%p600) target = $region68
      $region67: #{tpu_custom_call.1} parent=63 // pred_region
        _
      $region68: #{tpu_custom_call.1} parent=63 // pred_fallthru
        _
    $region64: #{tpu_custom_call.1} parent=5 // pred_fallthru
      _
    %p603 = scmp.le.s32.totalorder 2, %s17
    // Predicated region
    $region69: #{tpu_custom_call.1} parent=5 // pred_check
      %p604 = pneg %p603
    $region70: #{tpu_custom_call.1} parent=5 // pred_check_branch
      %606 = sbr.rel (%p604) target = $region72
    $region71: #{tpu_custom_call.1} parent=5 // pred_region
      %s607 = ssub.s32 %s17, 2
      // Predicated region
      $region73: #{tpu_custom_call.1} parent=71 // pred_check
        %p608 = pneg %p313
      $region74: #{tpu_custom_call.1} parent=71 // pred_check_branch
        %610 = sbr.rel (%p608) target = $region76
      $region75: #{tpu_custom_call.1} parent=71 // pred_region
        %p611 = scmp.lt.s32.totalorder %s28, 1
        %s612 = scalar_select %p611, %s28, 1
        %p613 = scmp.lt.s32.totalorder %s29, 0
        %s614 = scalar_select %p613, %s29, 0
        %s615 = sadd.s32 %s614, %s612
        %s616 = smul.addr %s615, 8
        %s617 = scalar_lea.vmem %s11, %s616
      $region76: #{tpu_custom_call.1} parent=71 // pred_fallthru
        _
    $region72: #{tpu_custom_call.1} parent=5 // pred_fallthru
      _
  $region6: #{tpu_custom_call.1} parent=0 // loop_footer
    %s21 = sadd.s32 1, %s17
  $region7: #{tpu_custom_call.1} parent=0 // loop_footer_branch
    %16 = sbr.rel target = $region3
  $region8: #{tpu_custom_call.1} parent=0 // loop_exit
    _

</llo_original>
